<compile_context>
chip_gen: v5e
topology: v5e:2x2
jax: 0.10.0
libtpu: 0.0.40
codegen_flags: <defaults>
</compile_context>

<pallas_src>
import functools

import jax
import jax.numpy as jnp
from jax.experimental import pallas as pl
from jax.experimental.pallas import tpu as pltpu

BN_EPS = 1e-5
LEAKY_SLOPE = 0.2
NHIDDEN = 128
LANE = 128


# ----------------------------------------------------------------------------
# Sizing helpers
# ----------------------------------------------------------------------------
def _vmem_limit_bytes():
    """Generation-aware scoped-VMEM limit (~3/4 of physical, capped)."""
    cap = 64 * 1024 * 1024
    try:
        cap = int(pltpu.get_tpu_info().vmem_capacity_bytes)
    except Exception:
        pass
    return int(min(cap * 3 // 4, 100 * 1024 * 1024))


def _compiler_params(vmem_limit):
    return pltpu.CompilerParams(
        dimension_semantics=("parallel", "parallel"),
        vmem_limit_bytes=int(vmem_limit))


def _round_up(n, m=LANE):
    return ((n + m - 1) // m) * m


def _pad_last(a, target):
    pad = target - a.shape[-1]
    if pad == 0:
        return a
    return jnp.pad(a, [(0, 0)] * (a.ndim - 1) + [(0, pad)])


def _pad_weight(w, cin_p, cout_p):
    kh, kw, cin, cout = w.shape
    return jnp.pad(w, ((0, 0), (0, 0), (0, cin_p - cin), (0, cout_p - cout)))


def _to_w3(w_hwio):
    """(kh,kw,Cin,Cout) -> (kw, kh*Cin, Cout): 3 row taps folded into K."""
    kh, kw, cin, cout = w_hwio.shape
    return jnp.transpose(w_hwio, (1, 0, 2, 3)).reshape(kw, kh * cin, cout)


def _pick_row_tile(H, W, cin_p, cout_p, vmem_limit):
    """Largest divisor TH of H whose estimated footprint (double-buffered
    pipeline blocks + in-kernel temporaries) fits ~70% of the scoped limit."""
    budget = int(vmem_limit * 0.7)
    cgb = 2 * cin_p

    def footprint(th):
        blocks = 2 * ((th + 4) * W * cin_p * 4            # x rows (f32)
                      + 2 * (th + 4) * W * cgb * 2        # gb (+gbs) rows, bf16
                      + 2 * th * W * cout_p * 4           # out + residual/x_s
                      + 2 * 9 * cin_p * cout_p * 2)       # conv + shortcut w
        temps = ((th + 2) * W * cin_p * (4 + 2)           # f32 + bf16 window
                 + 2 * th * W * 3 * cin_p * 2             # rows3 + rolled, bf16
                 + th * W * cout_p * 4)                   # f32 accumulator
        return blocks + temps

    best = 1
    for th in range(1, H + 1):
        if H % th == 0 and footprint(th) <= budget:
            best = th
    return best


# ----------------------------------------------------------------------------
# Shared in-kernel conv helper
# ----------------------------------------------------------------------------
def _conv3x3_taps(window_bf, w3_ref, rows, W, cin, cout):
    """3x3 conv (pad=1) over a row window.  The 3 row (dy) taps are folded into
    the matmul K dimension; only the 3 column taps need a roll + edge mask.
    window_bf: (rows+2, W, cin) bf16 with out-of-image halo rows already zeroed.
    w3_ref:    (3, 3*cin, cout) bf16 ref (kw-major, dy folded into K).
    Returns (rows*W, cout) f32."""
    rows3 = jnp.concatenate(
        [window_bf[0:rows], window_bf[1:rows + 1], window_bf[2:rows + 2]],
        axis=-1).reshape(rows * W, 3 * cin)
    col = jax.lax.broadcasted_iota(jnp.int32, (rows * W, 1), 0) % W
    zero = jnp.array(0, dtype=rows3.dtype)
    acc = jnp.zeros((rows * W, cout), jnp.float32)
    for dxs in range(3):
        shift = 1 - dxs
        if shift == 0:
            opnd = rows3
        else:
            rolled = pltpu.roll(rows3, shift % (rows * W), axis=0)
            edge = 0 if shift > 0 else W - 1
            opnd = jnp.where(col == edge, zero, rolled)
        acc = acc + jnp.dot(opnd, w3_ref[dxs],
                            preferred_element_type=jnp.float32)
    return acc


# ----------------------------------------------------------------------------
# BlockSpec builders (clamped halo rows; kernels zero them at image edges)
# ----------------------------------------------------------------------------
def _row_specs(TH, H, W, C):
    top = pl.BlockSpec((1, 1, W, C),
                       lambda n, r: (n, jnp.maximum(r * TH - 1, 0), 0, 0))
    mid = pl.BlockSpec((1, TH, W, C), lambda n, r: (n, r, 0, 0))
    bot = pl.BlockSpec((1, 1, W, C),
                       lambda n, r: (n, jnp.minimum(r * TH + TH, H - 1), 0, 0))
    return [top, mid, bot]


def _seg_row_specs(TH, H, W, C):
    t2 = pl.BlockSpec((1, 1, W, C),
                      lambda n, r: (n, jnp.maximum(r * TH - 2, 0), 0, 0))
    t1 = pl.BlockSpec((1, 1, W, C),
                      lambda n, r: (n, jnp.maximum(r * TH - 1, 0), 0, 0))
    mid = pl.BlockSpec((1, TH, W, C), lambda n, r: (n, r, 0, 0))
    b1 = pl.BlockSpec((1, 1, W, C),
                      lambda n, r: (n, jnp.minimum(r * TH + TH, H - 1), 0, 0))
    b2 = pl.BlockSpec((1, 1, W, C),
                      lambda n, r: (n, jnp.minimum(r * TH + TH + 1, H - 1), 0, 0))
    return [t2, t1, mid, b1, b2]


# ----------------------------------------------------------------------------
# Kernel: fused SPADE seg branch (shared 3x3 + ReLU -> gamma&beta 3x3)
# ----------------------------------------------------------------------------
def _spade_branch_kernel(s_t2, s_t1, s_mid, s_b1, s_b2,
                         w_sh_ref, b_sh_ref, w_gb_ref, b_gb_ref, out_ref,
                         *, TH, W, Cs, Ch, Cgb):
    r = pl.program_id(1)
    nr = pl.num_programs(1)
    H = nr * TH

    def halo(ref, cond):
        v = jnp.where(cond, 1.0, 0.0)
        return (ref[0].astype(jnp.float32) * v).astype(jnp.bfloat16)

    # segmap window with a 2-row halo; conv zero-padding at image edges
    seg_w = jnp.concatenate(
        [halo(s_t2, r * TH - 2 >= 0),
         halo(s_t1, r * TH - 1 >= 0),
         s_mid[0].astype(jnp.bfloat16),
         halo(s_b1, r * TH + TH <= H - 1),
         halo(s_b2, r * TH + TH + 1 <= H - 1)], axis=0)    # (TH+4, W, Cs)

    # mlp_shared: 3x3 conv + ReLU, recomputed with a 1-row halo (stays in VMEM)
    hid = _conv3x3_taps(seg_w, w_sh_ref, TH + 2, W, Cs, Ch)
    hid = jnp.maximum(hid + b_sh_ref[...].astype(jnp.float32), 0.0)
    hid = hid.reshape(TH + 2, W, Ch)

    # gamma/beta conv zero-padding acts on the *hidden* activation at the image
    # boundary: zero just the hidden halo rows that fall outside the image.
    top_v = jnp.where(r > 0, 1.0, 0.0)
    bot_v = jnp.where(r < nr - 1, 1.0, 0.0)
    hid_bf = jnp.concatenate(
        [hid[0:1] * top_v, hid[1:TH + 1], hid[TH + 1:TH + 2] * bot_v],
        axis=0).astype(jnp.bfloat16)

    gb = _conv3x3_taps(hid_bf, w_gb_ref, TH, W, Ch, Cgb)
    gb = gb + b_gb_ref[...].astype(jnp.float32)
    out_ref[0] = gb.reshape(TH, W, Cgb).astype(out_ref.dtype)


def spade_branch(segp, sp, *, TH, vmem_limit):
    N, H, W, Cs = segp.shape
    Ch = sp['w3_shared'].shape[-1]
    Cgb = sp['w3_gb'].shape[-1]
    nr = H // TH
    kern = functools.partial(_spade_branch_kernel,
                             TH=TH, W=W, Cs=Cs, Ch=Ch, Cgb=Cgb)
    in_specs = _seg_row_specs(TH, H, W, Cs) + [
        pl.BlockSpec(sp['w3_shared'].shape, lambda n, r: (0, 0, 0)),
        pl.BlockSpec((1, Ch), lambda n, r: (0, 0)),
        pl.BlockSpec(sp['w3_gb'].shape, lambda n, r: (0, 0, 0)),
        pl.BlockSpec((1, Cgb), lambda n, r: (0, 0))]
    return pl.pallas_call(
        kern, grid=(N, nr), in_specs=in_specs,
        out_specs=pl.BlockSpec((1, TH, W, Cgb), lambda n, r: (n, r, 0, 0)),
        out_shape=jax.ShapeDtypeStruct((N, H, W, Cgb), jnp.bfloat16),
        compiler_params=_compiler_params(vmem_limit))(
            segp, segp, segp, segp, segp,
            sp['w3_shared'], sp['b_shared'].reshape(1, Ch),
            sp['w3_gb'], sp['b_gb'].reshape(1, Cgb))


# ----------------------------------------------------------------------------
# Kernel: SPADE modulate + leaky-relu -> 3x3 conv, fused epilogues
# ----------------------------------------------------------------------------
def _fused_conv3x3_kernel(*refs, TH, W, Cin, Cout, Cs_out,
                          add_residual, emit_stats, shortcut):
    it = iter(refs)
    x_top, x_mid, x_bot = next(it), next(it), next(it)
    gb_top, gb_mid, gb_bot = next(it), next(it), next(it)
    st_ref = next(it)
    gbs_ref = next(it) if shortcut else None
    ws_ref = next(it) if shortcut else None
    w_ref = next(it)
    b_ref = next(it)
    res_ref = next(it) if add_residual else None
    out_ref = next(it)
    xs_ref = next(it) if shortcut else None
    st_out_ref = next(it) if emit_stats else None

    r = pl.program_id(1)
    nr = pl.num_programs(1)
    top_valid = jnp.where(r > 0, 1.0, 0.0)          # image row r*TH-1 exists?
    bot_valid = jnp.where(r < nr - 1, 1.0, 0.0)     # image row r*TH+TH exists?

    mean = st_ref[0:1, :]
    inv_std = st_ref[1:2, :]

    def modulate(v, g):
        h = ((v - mean) * inv_std) * (1.0 + g[..., :Cin]) + g[..., Cin:]
        return jnp.where(h >= 0.0, h, LEAKY_SLOPE * h)   # leaky-relu prologue

    mid = x_mid[0].astype(jnp.float32)               # raw rows (shortcut needs)
    top = modulate(x_top[0].astype(jnp.float32), gb_top[0].astype(jnp.float32))
    mid_mod = modulate(mid, gb_mid[0].astype(jnp.float32))
    bot = modulate(x_bot[0].astype(jnp.float32), gb_bot[0].astype(jnp.float32))

    # conv zero padding: zero only the out-of-image halo rows (post-modulation),
    # then ONE f32->bf16 cast of the window before the tap loop.
    window_bf = jnp.concatenate(
        [top * top_valid, mid_mod, bot * bot_valid],
        axis=0).astype(jnp.bfloat16)                  # (TH+2, W, Cin)

    acc = _conv3x3_taps(window_bf, w_ref, TH, W, Cin, Cout)
    acc = acc + b_ref[...].astype(jnp.float32)

    if emit_stats:   # per-tile batch-norm partial sums of this conv's output
        st_out_ref[0, 0] = jnp.concatenate(
            [jnp.sum(acc, axis=0, keepdims=True),
             jnp.sum(acc * acc, axis=0, keepdims=True)], axis=0)
    if add_residual:
        acc = acc + res_ref[0].astype(jnp.float32).reshape(TH * W, Cout)
    out_ref[0] = acc.reshape(TH, W, Cout).astype(out_ref.dtype)

    if shortcut:     # x_s = conv1x1(norm_s-modulated x), no bias / activation
        gbs = gbs_ref[0].astype(jnp.float32)
        hs = ((mid - mean) * inv_std) * (1.0 + gbs[..., :Cin]) + gbs[..., Cin:]
        xs = jnp.dot(hs.reshape(TH * W, Cin).astype(jnp.bfloat16), ws_ref[...],
                     preferred_element_type=jnp.float32)
        xs_ref[0] = xs.reshape(TH, W, Cs_out).astype(xs_ref.dtype)


def fused_conv3x3(x, w3, b, *, TH, vmem_limit, gb, st, residual=None,
                  emit_stats=False, shortcut_gb=None, shortcut_w=None,
                  out_dtype=jnp.bfloat16):
    N, H, W, Cin = x.shape
    Cout = w3.shape[-1]
    nr = H // TH
    add_residual = residual is not None
    shortcut = shortcut_w is not None
    Cs_out = int(shortcut_w.shape[-1]) if shortcut else 0

    inputs = [x, x, x, gb, gb, gb, st]
    in_specs = (_row_specs(TH, H, W, Cin)
                + _row_specs(TH, H, W, 2 * Cin)
                + [pl.BlockSpec((2, Cin), lambda n, r: (0, 0))])
    if shortcut:
        inputs += [shortcut_gb, shortcut_w]
        in_specs += [pl.BlockSpec((1, TH, W, 2 * Cin), lambda n, r: (n, r, 0, 0)),
                     pl.BlockSpec((Cin, Cs_out), lambda n, r: (0, 0))]
    inputs += [w3, b.reshape(1, Cout)]
    in_specs += [pl.BlockSpec(w3.shape, lambda n, r: (0, 0, 0)),
                 pl.BlockSpec((1, Cout), lambda n, r: (0, 0))]
    if add_residual:
        inputs.append(residual)
        in_specs.append(pl.BlockSpec((1, TH, W, Cout), lambda n, r: (n, r, 0, 0)))

    out_shape = [jax.ShapeDtypeStruct((N, H, W, Cout), out_dtype)]
    out_specs = [pl.BlockSpec((1, TH, W, Cout), lambda n, r: (n, r, 0, 0))]
    if shortcut:
        out_shape.append(jax.ShapeDtypeStruct((N, H, W, Cs_out), jnp.bfloat16))
        out_specs.append(pl.BlockSpec((1, TH, W, Cs_out), lambda n, r: (n, r, 0, 0)))
    if emit_stats:
        out_shape.append(jax.ShapeDtypeStruct((N, nr, 2, Cout), jnp.float32))
        out_specs.append(pl.BlockSpec((1, 1, 2, Cout), lambda n, r: (n, r, 0, 0)))

    multi = len(out_shape) > 1
    kern = functools.partial(
        _fused_conv3x3_kernel, TH=TH, W=W, Cin=Cin, Cout=Cout, Cs_out=Cs_out,
        add_residual=add_residual, emit_stats=emit_stats, shortcut=shortcut)

    # TODO(synk): weight/bias/stat specs have constant index maps; a single
    # resident buffer (pipeline_mode=pl.Buffered(1)) and a Cout-tiled weight
    # grid would further cut VMEM at 1024-channel layers.
    fn = pl.pallas_call(
        kern, grid=(N, nr), in_specs=in_specs,
        out_specs=tuple(out_specs) if multi else out_specs[0],
        out_shape=tuple(out_shape) if multi else out_shape[0],
        compiler_params=_compiler_params(vmem_limit))
    return fn(*inputs)


# ----------------------------------------------------------------------------
# Batch-norm statistics of the block input
# ----------------------------------------------------------------------------
def _bn_partial_kernel(x_ref, out_ref):
    x = x_ref[0].astype(jnp.float32)
    th, w, c = x.shape
    x2 = x.reshape(th * w, c)
    out_ref[0, 0] = jnp.concatenate(
        [jnp.sum(x2, axis=0, keepdims=True),
         jnp.sum(x2 * x2, axis=0, keepdims=True)], axis=0)


def bn_partial(x, TH, vmem_limit):
    N, H, W, C = x.shape
    nr = H // TH
    return pl.pallas_call(
        _bn_partial_kernel, grid=(N, nr),
        in_specs=[pl.BlockSpec((1, TH, W, C), lambda n, r: (n, r, 0, 0))],
        out_specs=pl.BlockSpec((1, 1, 2, C), lambda n, r: (n, r, 0, 0)),
        out_shape=jax.ShapeDtypeStruct((N, nr, 2, C), jnp.float32),
        compiler_params=_compiler_params(vmem_limit))(x)


def finalize_stats(partials, count):
    """(mean, 1/sqrt(var+eps)) per channel from per-tile partial sums."""
    s = jnp.sum(partials, axis=(0, 1))                      # (2, C)
    mean = s[0] / count
    var = jnp.maximum(s[1] / count - mean * mean, 0.0)      # clamp fp cancel
    inv_std = jax.lax.rsqrt(var + BN_EPS)
    return jnp.stack([mean, inv_std], axis=0).astype(jnp.float32)


# ----------------------------------------------------------------------------
# SPADEResnetBlock forward (glue around the Pallas kernels)
# ----------------------------------------------------------------------------
def spade_resnet_block_forward(x_nchw, seg_nchw, P, *, tile_rows=None):
    # TODO(synk): the NCHW<->NHWC transposes only exist to match the PyTorch
    # interface; an NHWC end-to-end pipeline would drop two full HBM passes.
    x = jnp.transpose(x_nchw, (0, 2, 3, 1)).astype(jnp.float32)
    seg = jnp.transpose(seg_nchw, (0, 2, 3, 1)).astype(jnp.float32)
    N, H, W, fin = x.shape
    Hs, Ws = seg.shape[1], seg.shape[2]

    # F.interpolate(seg, size=(H, W), mode='nearest')
    ih = (jnp.arange(H) * Hs) // H
    iw = (jnp.arange(W) * Ws) // W
    seg_r = seg[:, ih][:, :, iw]

    # Lane-dense channel padding (no-op when channels are already 128-multiples).
    xp = _pad_last(x, P['cin_p'])
    segp = _pad_last(seg_r, P['cs_p']).astype(jnp.bfloat16)

    vmem_limit = _vmem_limit_bytes()
    cmax = max(P['cin_p'], P['cmid_p'], P['cout_p'])
    TH = tile_rows if tile_rows is not None else _pick_row_tile(
        H, W, cmax, cmax, vmem_limit)
    assert H % TH == 0, (H, TH)
    # TODO(synk): W is assumed to be a sublane multiple (W % 8 == 0) so the
    # in-kernel (TH,W,C)<->(TH*W,C) reshapes are layout-free views.

    # Batch-norm stats of x: shared by norm_0 and norm_s (same input tensor).
    st_x = finalize_stats(bn_partial(xp, TH, vmem_limit), N * H * W)

    # Each SPADE branch: ONE kernel (shared conv+ReLU fused with gamma/beta conv)
    gb0 = spade_branch(segp, P['norm_0'], TH=TH, vmem_limit=vmem_limit)
    gb1 = spade_branch(segp, P['norm_1'], TH=TH, vmem_limit=vmem_limit)

    if P['learned_shortcut']:
        gbs = spade_branch(segp, P['norm_s'], TH=TH, vmem_limit=vmem_limit)
        # conv_0 with fused SPADE+leaky prologue, fused shortcut 1x1 conv and
        # emitted bn partial sums of dx.
        dx, x_s, st_dx_part = fused_conv3x3(
            xp, P['w3_0'], P['b_0'], TH=TH, gb=gb0, st=st_x,
            emit_stats=True, shortcut_gb=gbs, shortcut_w=P['w_s'],
            vmem_limit=vmem_limit)
    else:
        dx, st_dx_part = fused_conv3x3(
            xp, P['w3_0'], P['b_0'], TH=TH, gb=gb0, st=st_x,
            emit_stats=True, vmem_limit=vmem_limit)
        x_s = xp          # fin == fout -> identical (padded) channel count
    st_dx = finalize_stats(st_dx_part, N * H * W)

    # conv_1 with fused modulate + leaky prologue and fused residual add.
    out_p = fused_conv3x3(dx, P['w3_1'], P['b_1'], TH=TH, gb=gb1, st=st_dx,
                          residual=x_s, out_dtype=jnp.float32,
                          vmem_limit=vmem_limit)

    out = out_p[..., :P['fout']]
    return jnp.transpose(out, (0, 3, 1, 2))   # back to NCHW


# ----------------------------------------------------------------------------
# Deterministic parameter construction (synthetic weights)
# ----------------------------------------------------------------------------
def spectral_normalize(w_hwio, key, n_iter=1, eps=1e-12):
    """torch.nn.utils.spectral_norm mechanism: one power iteration on the
    (Cout, Cin*kh*kw) weight matrix, then divide the weight by sigma."""
    kh, kw, cin, cout = w_hwio.shape
    w_mat = jnp.transpose(w_hwio, (3, 2, 0, 1)).reshape(cout, -1)
    u = jax.random.normal(key, (cout,), jnp.float32)
    u = u / (jnp.linalg.norm(u) + eps)
    v = jnp.zeros((w_mat.shape[1],), jnp.float32)
    for _ in range(n_iter):
        v = w_mat.T @ u
        v = v / (jnp.linalg.norm(v) + eps)
        u = w_mat @ v
        u = u / (jnp.linalg.norm(u) + eps)
    sigma = u @ (w_mat @ v)
    return w_hwio / sigma


def init_spade_params(key, norm_nc, label_nc, nhidden=NHIDDEN):
    ks = jax.random.split(key, 6)
    return dict(
        w_shared=jax.random.normal(ks[0], (3, 3, label_nc, nhidden), jnp.float32) * 0.1,
        b_shared=jax.random.normal(ks[1], (nhidden,), jnp.float32) * 0.1,
        w_gamma=jax.random.normal(ks[2], (3, 3, nhidden, norm_nc), jnp.float32) * 0.1,
        b_gamma=jax.random.normal(ks[3], (norm_nc,), jnp.float32) * 0.1,
        w_beta=jax.random.normal(ks[4], (3, 3, nhidden, norm_nc), jnp.float32) * 0.1,
        b_beta=jax.random.normal(ks[5], (norm_nc,), jnp.float32) * 0.1,
    )


def init_params(key, fin, fout, label_nc):
    fmiddle = min(fin, fout)
    learned_shortcut = fin != fout
    keys = jax.random.split(key, 11)
    w0 = jax.random.normal(keys[0], (3, 3, fin, fmiddle), jnp.float32) * 0.1
    b0 = jax.random.normal(keys[1], (fmiddle,), jnp.float32) * 0.1
    w1 = jax.random.normal(keys[2], (3, 3, fmiddle, fout), jnp.float32) * 0.1
    b1 = jax.random.normal(keys[3], (fout,), jnp.float32) * 0.1
    params = dict(
        learned_shortcut=learned_shortcut,
        w_0=spectral_normalize(w0, keys[4]), b_0=b0,
        w_1=spectral_normalize(w1, keys[5]), b_1=b1,
        norm_0=init_spade_params(keys[6], fin, label_nc),
        norm_1=init_spade_params(keys[7], fmiddle, label_nc),
    )
    if learned_shortcut:
        ws = jax.random.normal(keys[8], (1, 1, fin, fout), jnp.float32) * 0.1
        params['w_s'] = spectral_normalize(ws, keys[9]).reshape(fin, fout)
        params['norm_s'] = init_spade_params(keys[10], fin, label_nc)
    return params


def prepare_params(params, label_nc):
    """Kernel-ready params: channels zero-padded to lane multiples of 128,
    gamma/beta conv weights fused (concat Cout), conv weights converted to the
    (kw, 3*Cin, Cout) bf16 "w3" form (dy taps folded into K)."""
    fin = params['w_0'].shape[2]
    fmiddle = params['w_0'].shape[3]
    fout = params['w_1'].shape[3]
    cin_p, cmid_p, cout_p = _round_up(fin), _round_up(fmiddle), _round_up(fout)
    cs_p = _round_up(label_nc)

    def prep_spade(sp, c_p):
        w_gb = jnp.concatenate([_pad_weight(sp['w_gamma'], NHIDDEN, c_p),
                                _pad_weight(sp['w_beta'], NHIDDEN, c_p)],
                               axis=-1)
        b_gb = jnp.concatenate([_pad_last(sp['b_gamma'], c_p),
                                _pad_last(sp['b_beta'], c_p)], axis=-1)
        return dict(
            w3_shared=_to_w3(_pad_weight(sp['w_shared'], cs_p, NHIDDEN)).astype(jnp.bfloat16),
            b_shared=sp['b_shared'].astype(jnp.float32),
            w3_gb=_to_w3(w_gb).astype(jnp.bfloat16),
            b_gb=b_gb.astype(jnp.float32))

    out = dict(
        learned_shortcut=params['learned_shortcut'],
        fin=fin, fmiddle=fmiddle, fout=fout,
        cin_p=cin_p, cmid_p=cmid_p, cout_p=cout_p, cs_p=cs_p,
        w3_0=_to_w3(_pad_weight(params['w_0'], cin_p, cmid_p)).astype(jnp.bfloat16),
        b_0=_pad_last(params['b_0'], cmid_p).astype(jnp.float32),
        w3_1=_to_w3(_pad_weight(params['w_1'], cmid_p, cout_p)).astype(jnp.bfloat16),
        b_1=_pad_last(params['b_1'], cout_p).astype(jnp.float32),
        norm_0=prep_spade(params['norm_0'], cin_p),
        norm_1=prep_spade(params['norm_1'], cmid_p),
    )
    if params['learned_shortcut']:
        ws = jnp.pad(params['w_s'], ((0, cin_p - fin), (0, cout_p - fout)))
        out['w_s'] = ws.astype(jnp.bfloat16)
        out['norm_s'] = prep_spade(params['norm_s'], cin_p)
    return out


# ----------------------------------------------------------------------------
if __name__ == "__main__":
    key = jax.random.PRNGKey(0)
    N, fin, fout = 2, 4, 8          # fin != fout -> learned-shortcut path
    H = W = 16
    label_nc = 3
    Hs = Ws = 8                     # low-res segmap -> nearest upsample

    raw_params = init_params(key, fin, fout, label_nc)
    params = prepare_params(raw_params, label_nc)

    kx, ks = jax.random.split(jax.random.fold_in(key, 123))
    x = jax.random.normal(kx, (N, fin, H, W), jnp.float32)
    seg = jax.random.normal(ks, (N, label_nc, Hs, Ws), jnp.float32)

    # tile_rows=4 -> 4 row tiles per image: exercises top-edge, interior and
    # bottom-edge halo handling plus the (batch, row-tile) parallel grid.
    out = spade_resnet_block_forward(x, seg, params, tile_rows=4)
    out = jax.block_until_ready(out)
    assert out.shape == (N, fout, H, W), out.shape
    assert bool(jnp.all(jnp.isfinite(out)))
    print("KERNEL_OK")
</pallas_src>

<mosaic_0001>
module attributes {stable_mosaic.version = 11 : i64} {
  func.func @_bn_partial_kernel(%arg0: i32, %arg1: i32, %arg2: memref<1x4x16x128xf32, #tpu.memory_space<vmem>>, %arg3: memref<1x1x2x128xf32, #tpu.memory_space<vmem>>) attributes {dimension_semantics = [#tpu.dimension_semantics<parallel>, #tpu.dimension_semantics<parallel>], iteration_bounds = array<i64: 2, 4>, scalar_prefetch = 0 : i64, scratch_operands = 0 : i64, tpu.core_type = #tpu.core_type<tc>, window_params = [{transform_indices = @transform_0, window_bounds = array<i64: 1, 4, 16, 128>}, {transform_indices = @transform_1, window_bounds = array<i64: 1, 1, 2, 128>}]} {
    %c0 = arith.constant 0 : index
    %c0_0 = arith.constant 0 : index
    %c0_1 = arith.constant 0 : index
    %c0_2 = arith.constant 0 : index
    %0 = vector.load %arg2[%c0, %c0_0, %c0_1, %c0_2] : memref<1x4x16x128xf32, #tpu.memory_space<vmem>>, vector<1x4x16x128xf32>
    %1 = vector.shape_cast %0 : vector<1x4x16x128xf32> to vector<4x16x128xf32>
    %2 = vector.shape_cast %1 : vector<4x16x128xf32> to vector<64x128xf32>
    %cst = arith.constant dense<0.000000e+00> : vector<128xf32>
    %3 = vector.multi_reduction <add>, %2, %cst [0] : vector<64x128xf32> to vector<128xf32>
    %4 = vector.shape_cast %3 : vector<128xf32> to vector<1x128xf32>
    %5 = arith.mulf %2, %2 : vector<64x128xf32>
    %cst_3 = arith.constant dense<0.000000e+00> : vector<128xf32>
    %6 = vector.multi_reduction <add>, %5, %cst_3 [0] : vector<64x128xf32> to vector<128xf32>
    %7 = vector.shape_cast %6 : vector<128xf32> to vector<1x128xf32>
    %8 = tpu.concatenate %4, %7 in 0 : vector<1x128xf32>, vector<1x128xf32> -> vector<2x128xf32>
    %c0_4 = arith.constant 0 : index
    %c0_5 = arith.constant 0 : index
    %c0_6 = arith.constant 0 : index
    %c0_7 = arith.constant 0 : index
    %9 = vector.load %arg3[%c0_4, %c0_5, %c0_6, %c0_7] : memref<1x1x2x128xf32, #tpu.memory_space<vmem>>, vector<1x1x2x128xf32>
    %10 = vector.shape_cast %9 : vector<1x1x2x128xf32> to vector<2x128xf32>
    %11 = vector.shape_cast %8 : vector<2x128xf32> to vector<1x1x2x128xf32>
    tpu.vector_store %arg3[%c0_4, %c0_5, %c0_6, %c0_7], %11 {strides = array<i32>} : memref<1x1x2x128xf32, #tpu.memory_space<vmem>>, vector<1x1x2x128xf32>,
    return
  }
  func.func @transform_0(%arg0: i32, %arg1: i32) -> (i32, i32, i32, i32) {
    %c0_i32 = arith.constant 0 : i32
    %c0_i32_0 = arith.constant 0 : i32
    %c0_i32_1 = arith.constant 0 : i32
    return %arg0, %arg1, %c0_i32, %c0_i32_0 : i32, i32, i32, i32
  }
  func.func @transform_1(%arg0: i32, %arg1: i32) -> (i32, i32, i32, i32) {
    %c0_i32 = arith.constant 0 : i32
    %c0_i32_0 = arith.constant 0 : i32
    %c0_i32_1 = arith.constant 0 : i32
    return %arg0, %arg1, %c0_i32, %c0_i32_0 : i32, i32, i32, i32
  }
}

</mosaic_0001>

<llo_original>
// kernel: tpu_custom_call.1
$region0: #{tpu_custom_call.1}
  #allocation0 [shape = 'u32[]', space=smem, size = 0x4, offset = 0x4, fixed_abs, tag = 'smem constant byte address 0x4 - core index']
  #allocation1 [shape = 'u32[72,128]{1,0:T(1,128)}', space=vmem, size = 0x9000, scoped, tag = 'internal scratch']
  %s0 = inlined_call_operand.hbm [shape: f32[2,16,16,128], index: 0, kind: input, shape index: {}]
  %s1 = inlined_call_operand.hbm [shape: f32[2,4,2,128], index: 1, kind: output, shape index: {}]
  %s2 = sld [smem:[#allocation0]]
  $region41: #{tpu_custom_call.1} parent=0
    _
  %s4 = ssub.s32 1, %s2
  %s5 = scalar_select 0, %s4, %s2
  $region1: #{tpu_custom_call.1} parent=0
    #allocation2 [shape = 'u8[65536]{0}', space=vmem, size = 0x10000, scoped, tag = 'input window, operand 0']
    #allocation3 [shape = 's32[2]{0}', space=sflag, size = 0x8, scoped, tag = 'scoped memory for tpu_custom_call.1']
    #allocation4 [shape = 's32[2]{0}', space=sflag, size = 0x8, scoped, tag = 'scoped memory for tpu_custom_call.1']
    #allocation5 [shape = 'u8[2048]{0}', space=vmem, size = 0x800, scoped, tag = 'output window, operand 0']
    %6 = vsyncpa [#allocation3], 0
    %s7 = scalar_lea.sflag [#allocation3], 1
    %8 = vsyncpa %s7, 0
    %9 = vsyncpa [#allocation4], 0
    %s10 = scalar_lea.sflag [#allocation4], 1
    %11 = vsyncpa %s10, 0
    loop: start=0, step=1, limit=10
    $region2: #{tpu_custom_call.1} parent=1 // loop_pre_header
      _
    $region3: #{tpu_custom_call.1} parent=1 // loop_header
      %s13 = sphi 0, %s17
      %p14 = scmp.ge.s32.totalorder %s13, 10
      %s20 = sphi 0, %s32
      %s21 = sphi 0, %s28
      %s22 = sphi 0, %s20
      %s23 = sphi 0, %s21
      %s24 = sphi 0, %s22
      %s25 = sphi 0, %s23
      %s37 = sphi 0, %s39
      %s40 = sphi 0, %s37
      %s41 = sphi 0, %s40
      %s57 = sphi 0, %s41
      %s65 = sphi 0, %s67
      %s68 = sphi 0, %s65
      %s69 = sphi 0, %s68
      %s85 = sphi 0, %s69
    $region4: #{tpu_custom_call.1} parent=1 // loop_header_branch
      %16 = sbr.rel (%p14) target = $region8
    $region5: #{tpu_custom_call.1} parent=1 // loop_body
      %s18 = ssub.s32 %s13, 1
      %s19 = ssub.s32 %s13, 2
      %s26 = sadd.s32 1, %s21
      %p27 = scmp.ge.s32.totalorder %s26, 4
      %s28 = scalar_select %p27, 0, %s26
      %s29 = sadd.s32 1, %s20
      %s30 = scalar_select %p27, %s29, %s20
      %p31 = scmp.ge.s32.totalorder %s30, 2
      %s32 = scalar_select %p31, 0, %s30
      %s33 = ssub.s32 %s20, %s32
      %s34 = ssub.s32 %s21, %s28
      %s35 = sor.u32 %s33, %s34
      %p36 = scmp.eq.s32.totalorder %s35, 0
      %s38 = sadd.s32 %s37, 1
      %s39 = scalar_select %p36, %s37, %s38
      %p42 = pneg %p36
      %p43 = scmp.eq.s32.totalorder %s13, 7
      %p44 = por %p42, %p43
      %p45 = scmp.ne.s32.totalorder %s37, %s40
      %p46 = scmp.eq.s32.totalorder %s13, 0
      %p47 = por %p45, %p46
      %p48 = scmp.ne.s32.totalorder %s37, %s40
      %p49 = scmp.eq.s32.totalorder %s18, 7
      %p50 = por %p48, %p49
      %p51 = scmp.ne.s32.totalorder %s40, %s41
      %p52 = scmp.eq.s32.totalorder %s18, 0
      %p53 = por %p51, %p52
      %p54 = scmp.ne.s32.totalorder %s40, %s41
      %p55 = scmp.eq.s32.totalorder %s19, 7
      %p56 = por %p54, %p55
      %p58 = scmp.ne.s32.totalorder %s41, %s57
      %p59 = scmp.eq.s32.totalorder %s19, 0
      %p60 = por %p58, %p59
      %s61 = ssub.s32 %s20, %s32
      %s62 = ssub.s32 %s21, %s28
      %s63 = sor.u32 %s61, %s62
      %p64 = scmp.eq.s32.totalorder %s63, 0
      %s66 = sadd.s32 %s65, 1
      %s67 = scalar_select %p64, %s65, %s66
      %p70 = pneg %p64
      %p71 = scmp.eq.s32.totalorder %s13, 7
      %p72 = por %p70, %p71
      %p73 = scmp.ne.s32.totalorder %s65, %s68
      %p74 = scmp.eq.s32.totalorder %s13, 0
      %p75 = por %p73, %p74
      %p76 = scmp.ne.s32.totalorder %s65, %s68
      %p77 = scmp.eq.s32.totalorder %s18, 7
      %p78 = por %p76, %p77
      %p79 = scmp.ne.s32.totalorder %s68, %s69
      %p80 = scmp.eq.s32.totalorder %s18, 0
      %p81 = por %p79, %p80
      %p82 = scmp.ne.s32.totalorder %s68, %s69
      %p83 = scmp.eq.s32.totalorder %s19, 7
      %p84 = por %p82, %p83
      %p86 = scmp.ne.s32.totalorder %s69, %s85
      %p87 = scmp.eq.s32.totalorder %s19, 0
      %p88 = por %p86, %p87
      %p89 = scmp.le.s32.totalorder 1, %s13
      %p90 = scmp.lt.s32.totalorder %s13, 9
      %p91 = pnand %p89, %p90
      %p92 = pneg %p91
      // Predicated region
      $region9: #{tpu_custom_call.1} parent=5 // pred_check
        _
      $region10: #{tpu_custom_call.1} parent=5 // pred_check_branch
        %94 = sbr.rel (%p91) target = $region12
      $region11: #{tpu_custom_call.1} parent=5 // pred_region
        %s95 = ssub.s32 %s13, 1
      $region12: #{tpu_custom_call.1} parent=5 // pred_fallthru
        _
      %p96 = scmp.lt.s32.totalorder %s13, 8
      // Predicated region
      $region13: #{tpu_custom_call.1} parent=5 // pred_check
        %p97 = pneg %p96
      $region14: #{tpu_custom_call.1} parent=5 // pred_check_branch
        %99 = sbr.rel (%p97) target = $region16
      $region15: #{tpu_custom_call.1} parent=5 // pred_region
        // Predicated region
        $region17: #{tpu_custom_call.1} parent=15 // pred_check
          %p100 = pneg %p47
        $region18: #{tpu_custom_call.1} parent=15 // pred_check_branch
          %102 = sbr.rel (%p100) target = $region20
        $region19: #{tpu_custom_call.1} parent=15 // pred_region
          %s103 = sand.u32 %s37, 1
          %s104 = scalar_lea.sflag [#allocation3], %s103
          %s105 = sand.u32 %s37, 1
          %s106 = smul.addr %s105, 64
          %s107 = scalar_lea.vmem [#allocation2], %s106
          %s108 = smul.u32 4, %s21
          %110 = vsyncadd %s104, 0
          %s111 = smul.addr %s108, 2
          %s112 = smul.addr %s20, 32
          %s113 = sadd.s32 %s111, %s112
          %s114 = smul.addr %s113, 8
          %s115 = scalar_lea.hbm %s0, %s114
          %s116 = sshll.u32 %s115, 4
          %s117 = int_to_ptr.hbm [resolvable:$true] %s116
          %s118 = sshll.u32 %s107, 4
          %s119 = int_to_ptr.vmem [resolvable:$true] %s118
          %124 = dma.hbm_to_vmem [thread:$0]  %s117, 1024, %s119, %s104, 128, 128, 8
        $region20: #{tpu_custom_call.1} parent=15 // pred_fallthru
          _
      $region16: #{tpu_custom_call.1} parent=5 // pred_fallthru
        _
      %p125 = scmp.le.s32.totalorder 1, %s13
      %p126 = scmp.lt.s32.totalorder %s13, 9
      %p127 = pnand %p125, %p126
      %p128 = pneg %p127
      // Predicated region
      $region21: #{tpu_custom_call.1} parent=5 // pred_check
        _
      $region22: #{tpu_custom_call.1} parent=5 // pred_check_branch
        %130 = sbr.rel (%p127) target = $region24
      $region23: #{tpu_custom_call.1} parent=5 // pred_region
        %s131 = ssub.s32 %s13, 1
        %s132 = sand.u32 %s40, 1
        %s133 = scalar_lea.sflag [#allocation3], %s132
        %s134 = sand.u32 %s40, 1
        %s135 = smul.addr %s134, 64
        %s136 = scalar_lea.vmem [#allocation2], %s135
        // Predicated region
        $region25: #{tpu_custom_call.1} parent=23 // pred_check
          %p137 = pneg %p53
        $region26: #{tpu_custom_call.1} parent=23 // pred_check_branch
          %139 = sbr.rel (%p137) target = $region28
        $region27: #{tpu_custom_call.1} parent=23 // pred_region
          %141 = dma.done %s133, 1024
        $region28: #{tpu_custom_call.1} parent=23 // pred_fallthru
          _
        %s142 = sand.u32 %s40, 1
        %s143 = scalar_lea.sflag [#allocation3], %s142
        %s144 = sand.u32 %s40, 1
        %s145 = smul.addr %s144, 64
        %s146 = scalar_lea.vmem [#allocation2], %s145
        %p147 = pneg %p53
        %p148 = pneg %p50
        %p149 = pneg %p81
        %p150 = pneg %p78
        %s151 = sand.u32 %s68, 1
        %s152 = scalar_lea.sflag [#allocation4], %s151
        %s153 = sand.u32 %s68, 1
        %s154 = smul.addr %s153, 2
        %s155 = scalar_lea.vmem [#allocation5], %s154
        %s156 = smul.u32 4, %s23
        %v157 = vld [vmem:[%s136] sm:$0xff]
        %v158 = vld [vmem:[%s136 + $0x8] sm:$0xff]
        %v159 = vld [vmem:[%s136 + $0x10] sm:$0xff]
        %v160 = vld [vmem:[%s136 + $0x18] sm:$0xff]
        %v161 = vld [vmem:[%s136 + $0x20] sm:$0xff]
        %v162 = vld [vmem:[%s136 + $0x28] sm:$0xff]
        %v163 = vld [vmem:[%s136 + $0x30] sm:$0xff]
        %v164 = vld [vmem:[%s136 + $0x38] sm:$0xff]
        %v165 = vadd.f32 %v157, %v158
        %v166 = vadd.f32 %v165, %v159
        %v167 = vadd.f32 %v166, %v160
        %v168 = vadd.f32 %v167, %v161
        %v169 = vadd.f32 %v168, %v162
        %v170 = vadd.f32 %v169, %v163
        %v171 = vadd.f32 %v170, %v164
        %v172 = vrot.slane %v171, 4
        %v173 = vadd.f32 %v171, %v172
        %v174 = vrot.slane %v173, 2
        %v175 = vadd.f32 %v173, %v174
        %v176 = vrot.slane %v175, 1
        %v177 = vadd.f32 %v175, %v176
        %v178 = vmul.f32 %v157, %v157
        %v179 = vmul.f32 %v158, %v158
        %v180 = vmul.f32 %v159, %v159
        %v181 = vmul.f32 %v160, %v160
        %v182 = vmul.f32 %v161, %v161
        %v183 = vmul.f32 %v162, %v162
        %v184 = vmul.f32 %v163, %v163
        %v185 = vmul.f32 %v164, %v164
        %v186 = vadd.f32 %v178, %v179
        %v187 = vadd.f32 %v186, %v180
        %v188 = vadd.f32 %v187, %v181
        %v189 = vadd.f32 %v188, %v182
        %v190 = vadd.f32 %v189, %v183
        %v191 = vadd.f32 %v190, %v184
        %v192 = vadd.f32 %v191, %v185
        %v193 = vrot.slane %v192, 4
        %v194 = vadd.f32 %v192, %v193
        %v195 = vrot.slane %v194, 2
        %v196 = vadd.f32 %v194, %v195
        %v197 = vrot.slane %v196, 1
        %v198 = vadd.f32 %v196, %v197
        %vm199 = vcmask 1040384
        %v200 = vsel %vm199, %v177, %v198
        %201 = vst [vmem:[%s155] sm:$0x3] %v200
        %s202 = sand.u32 %s68, 1
        %s203 = scalar_lea.sflag [#allocation4], %s202
        %s204 = sand.u32 %s68, 1
        %s205 = smul.addr %s204, 2
        %s206 = scalar_lea.vmem [#allocation5], %s205
        // Predicated region
        $region29: #{tpu_custom_call.1} parent=23 // pred_check
          %p207 = pneg %p78
        $region30: #{tpu_custom_call.1} parent=23 // pred_check_branch
          %209 = sbr.rel (%p207) target = $region32
        $region31: #{tpu_custom_call.1} parent=23 // pred_region
          %211 = vsyncadd %s203, 0
          %s212 = smul.addr %s22, 4
          %s213 = sadd.s32 %s23, %s212
          %s214 = smul.addr %s213, 2
          %s215 = scalar_lea.hbm %s1, %s214
          %s217 = sshll.u32 %s206, 4
          %s218 = int_to_ptr.vmem [resolvable:$true] %s217
          %s219 = sshll.u32 %s215, 4
          %s220 = int_to_ptr.hbm [resolvable:$true] %s219
          %222 = dma.vmem_to_hbm [thread:$0]  %s218, 32, %s220, %s203
        $region32: #{tpu_custom_call.1} parent=23 // pred_fallthru
          _
      $region24: #{tpu_custom_call.1} parent=5 // pred_fallthru
        _
      %p223 = scmp.le.s32.totalorder 2, %s13
      // Predicated region
      $region33: #{tpu_custom_call.1} parent=5 // pred_check
        %p224 = pneg %p223
      $region34: #{tpu_custom_call.1} parent=5 // pred_check_branch
        %226 = sbr.rel (%p224) target = $region36
      $region35: #{tpu_custom_call.1} parent=5 // pred_region
        %s227 = ssub.s32 %s13, 2
        // Predicated region
        $region37: #{tpu_custom_call.1} parent=35 // pred_check
          %p228 = pneg %p84
        $region38: #{tpu_custom_call.1} parent=35 // pred_check_branch
          %230 = sbr.rel (%p228) target = $region40
        $region39: #{tpu_custom_call.1} parent=35 // pred_region
          %s231 = sand.u32 %s69, 1
          %s232 = scalar_lea.sflag [#allocation4], %s231
          %s233 = sand.u32 %s69, 1
          %s234 = smul.addr %s233, 2
          %s235 = scalar_lea.vmem [#allocation5], %s234
          %237 = dma.done %s232, 32
        $region40: #{tpu_custom_call.1} parent=35 // pred_fallthru
          _
      $region36: #{tpu_custom_call.1} parent=5 // pred_fallthru
        _
    $region6: #{tpu_custom_call.1} parent=1 // loop_footer
      %s17 = sadd.s32 1, %s13
    $region7: #{tpu_custom_call.1} parent=1 // loop_footer_branch
      %12 = sbr.rel target = $region3
    $region8: #{tpu_custom_call.1} parent=1 // loop_exit
      _
    %238 = vsyncpa [#allocation3], 1
    %s239 = scalar_lea.sflag [#allocation3], 1
    %240 = vsyncpa %s239, 1
    %241 = vsyncpa [#allocation4], 1
    %s242 = scalar_lea.sflag [#allocation4], 1
    %243 = vsyncpa %s242, 1

</llo_original>
